<compile_context>
chip_gen: v6e
topology: v6e:2x2x1
jax: 0.10.0
libtpu: 0.0.40
codegen_flags: <defaults>
</compile_context>

<pallas_src>
import jax
import jax.numpy as jnp
from jax import lax
from jax.experimental import pallas as pl
from jax.experimental.pallas import tpu as pltpu


_NEG = -1e30  # finite "-inf": masked lanes never feed NaN/Inf into exp/max


def _round_up(x: int, m: int) -> int:
    return ((x + m - 1) // m) * m


def _cdiv(a: int, b: int) -> int:
    return (a + b - 1) // b


def _make_multi_criterion_kernel(num_heads, scales, true_b, true_c, tile_b, tile_c):
    scales = tuple(float(s) for s in scales)

    def kernel(*refs):
        head_refs = refs[:num_heads]          # each: VMEM [TB, TC] logits chunk
        tgt_ref = refs[num_heads]             # VMEM [TB, 1] int32 class ids
        out_ref = refs[num_heads + 1]         # VMEM [1, 8, 128] per-tile partial
        m_sc = refs[num_heads + 2]            # VMEM [H, TB, 1] running max
        s_sc = refs[num_heads + 3]            # VMEM [H, TB, 1] running sum(exp)
        t_sc = refs[num_heads + 4]            # VMEM [H, TB, 1] running x[target]

        i = pl.program_id(0)                  # batch tile (parallel)
        k = pl.program_id(1)                  # class chunk (reduction, arbitrary)
        nk = pl.num_programs(1)

        @pl.when(k == 0)
        def _init():
            m_sc[...] = jnp.full_like(m_sc, _NEG)
            s_sc[...] = jnp.zeros_like(s_sc)
            t_sc[...] = jnp.zeros_like(t_sc)

        tgt = tgt_ref[...]                                               # [TB, 1]
        row_ids = lax.broadcasted_iota(jnp.int32, (tile_b, 1), 0) + i * tile_b
        valid_row = row_ids < true_b                                     # [TB, 1]
        cls_ids = lax.broadcasted_iota(jnp.int32, (tile_b, tile_c), 1) + k * tile_c
        valid_col = cls_ids < true_c                                     # [TB, TC]
        keep = jnp.logical_and(valid_row, valid_col)                     # [TB, TC]
        label_hit = cls_ids == tgt                                       # [TB, TC]

        for h in range(num_heads):            # static unroll; H is small (2-3 heads)
            x = head_refs[h][...].astype(jnp.float32)                    # [TB, TC]
            # Mask ragged batch/class tails BEFORE exp/max so undefined tail
            # reads (no wrapper-side padding) cannot produce NaN.
            x = jnp.where(keep, x, _NEG)
            m_prev = m_sc[h]                                             # [TB, 1]
            m_new = jnp.maximum(m_prev, jnp.max(x, axis=-1, keepdims=True))
            alpha = jnp.exp(m_prev - m_new)
            s_sc[h] = alpha * s_sc[h] + jnp.sum(jnp.exp(x - m_new),
                                                axis=-1, keepdims=True)
            # where-select instead of one-hot multiply (no [TB,TC] f32 mask vreg)
            t_sc[h] = t_sc[h] + jnp.sum(jnp.where(label_hit, x, 0.0),
                                        axis=-1, keepdims=True)
            m_sc[h] = m_new

        @pl.when(k == nk - 1)
        def _finalize():
            # Single per-row weighted NLL accumulator across heads; one reduce.
            row = jnp.zeros((tile_b, 1), jnp.float32)
            for h in range(num_heads):
                # per-sample NLL = m + log(sum exp(x - m)) - x[target]
                nll = m_sc[h] + jnp.log(s_sc[h]) - t_sc[h]
                row = row + jnp.float32(scales[h]) * nll
            row = jnp.where(valid_row, row, 0.0)
            # Lane-dense store of this tile's partial loss (wrapper reads [:,0,0]).
            out_ref[...] = jnp.full((1, 8, 128), jnp.sum(row), dtype=jnp.float32)

    return kernel


def multi_criterion(outputs, target, weights, *, reduction="mean",
                    batch_tile=512, stream_dtype=None,
                    vmem_budget_bytes=48 * 1024 * 1024):
    """Pallas implementation of MultiCriterion.forward (cross-entropy criterion).

    outputs:      list of [B, C] logits (entries may be None; any float dtype)
    target:       [B] integer class ids
    weights:      list of python floats (static), same length as outputs
    stream_dtype: optional narrower dtype (e.g. jnp.bfloat16) for streaming the
                  logits to the kernel; in-kernel math stays f32.
    vmem_budget_bytes: per-call VMEM budget the tiling must fit in.  48 MiB is
                  safe on v7x (64 MiB physical); raise to ~96 MiB on v5e/v6e.
    """
    # Static filtering of None outputs / zero weights, exactly like torch forward.
    kept = [(o, float(w)) for o, w in zip(outputs, weights)
            if (o is not None) and (w is not None) and (float(w) != 0.0)]
    assert len(kept) > 0, "no active heads"
    num_heads = len(kept)
    B, C = kept[0][0].shape
    for o, _ in kept:
        assert o.shape == (B, C), "all heads must share the same [B, C] shape"

    # Per-head compile-time scale = weight (* 1/B for reduction='mean').
    if reduction == "mean":
        scales = [w / float(B) for _, w in kept]
    elif reduction == "sum":
        scales = [w for _, w in kept]
    else:
        # TODO(synk): reduction='none' returns a per-sample vector per head and has
        # no meaningful scalar "sum of heads"; only 'mean'/'sum' are implemented.
        raise NotImplementedError("reduction must be 'mean' or 'sum'")

    # Optionally stream logits in a narrower dtype to halve HBM traffic.
    heads = [o if stream_dtype is None else o.astype(stream_dtype) for o, _ in kept]
    stream_bytes = jnp.dtype(heads[0].dtype).itemsize
    # bf16 packs two rows per sublane -> prefer 16-row alignment (perf, not a
    # hard constraint); fall back to 8 for tiny batches.
    sub = 16 if (stream_bytes == 2 and B >= 16) else 8

    tgt = jnp.asarray(target, dtype=jnp.int32).reshape(B, 1)

    # --- VMEM-budget-driven tiling (no wrapper-side padding).
    # Live VMEM ~= 2 (double-buffer) * (H*tb*tc*bytes + targets) + out + scratch.
    usable = int(vmem_budget_bytes * 0.8)

    def live_bytes(tb, tc):
        per_step = num_heads * tb * tc * stream_bytes + tb * 4
        scratch = 3 * num_heads * _round_up(tb, 8) * 128 * 4   # lane-padded f32
        return 2 * per_step + 2 * 8 * 128 * 4 + scratch

    if B <= sub:
        tile_b = B                                   # single full-extent block
    else:
        tile_b = min(_round_up(batch_tile, sub), (B // sub) * sub)
    tile_c = C
    # Shrink the class chunk first: keeps batch tiles roofline-sized.
    while live_bytes(tile_b, tile_c) > usable and tile_c > 128:
        tile_c = max(128, _round_up(tile_c // 2, 128))
    while live_bytes(tile_b, tile_c) > usable and tile_b > sub:
        tile_b = max(sub, _round_up(tile_b // 2, sub))
    # Give the second TensorCore (v7x megacore) something to shard when possible.
    if _cdiv(B, tile_b) == 1 and B > sub:
        tile_b = _round_up(_cdiv(B, 2), sub)

    num_b_tiles = _cdiv(B, tile_b)
    num_c_tiles = _cdiv(C, tile_c)

    kernel = _make_multi_criterion_kernel(num_heads, scales, B, C, tile_b, tile_c)

    in_specs = [pl.BlockSpec((tile_b, tile_c), lambda i, k: (i, k))
                for _ in range(num_heads)]
    in_specs.append(pl.BlockSpec((tile_b, 1), lambda i, k: (i, 0)))     # targets

    partials = pl.pallas_call(
        kernel,
        out_shape=jax.ShapeDtypeStruct((num_b_tiles, 8, 128), jnp.float32),
        grid=(num_b_tiles, num_c_tiles),
        in_specs=in_specs,
        out_specs=pl.BlockSpec((1, 8, 128), lambda i, k: (i, 0, 0)),
        scratch_shapes=[pltpu.VMEM((num_heads, tile_b, 1), jnp.float32)] * 3,
        compiler_params=pltpu.CompilerParams(
            dimension_semantics=("parallel", "arbitrary"),
            vmem_limit_bytes=int(vmem_budget_bytes),
        ),
    )(*heads, tgt)

    # Tiny final reduction over per-tile partials in plain JAX.
    return jnp.sum(partials[:, 0, 0])


if __name__ == "__main__":
    key = jax.random.PRNGKey(0)
    B, C = 8, 32                        # batch=8, classes(hidden)=32
    k1, k2, k3 = jax.random.split(key, 3)

    # Two active model heads + one None head; deterministic head weights.
    head0 = jax.random.normal(k1, (B, C), jnp.float32)
    head1 = jax.random.normal(k2, (B, C), jnp.float32)
    outputs = [head0, head1, None]
    head_weights = [1.0, 0.4, 0.0]      # third entry skipped (None output / zero weight)

    target = jax.random.randint(k3, (B,), 0, C)

    loss = jax.block_until_ready(multi_criterion(outputs, target, head_weights))

    # bf16-streaming path (halves HBM traffic; in-kernel math stays f32).
    loss_bf16 = jax.block_until_ready(
        multi_criterion(outputs, target, head_weights, stream_dtype=jnp.bfloat16))

    # pure-JAX reference (cross_entropy, reduction='mean', weighted sum over heads)
    target_onehot = jax.nn.one_hot(target, C, dtype=jnp.float32)

    def ref_ce(x, oh):
        logp = jax.nn.log_softmax(x, axis=-1)
        return jnp.mean(-jnp.sum(oh * logp, axis=-1))

    ref = 1.0 * ref_ce(head0, target_onehot) + 0.4 * ref_ce(head1, target_onehot)
    assert jnp.allclose(loss, ref, rtol=1e-5, atol=1e-5), (loss, ref)
    assert jnp.allclose(loss_bf16, ref, rtol=5e-2, atol=5e-2), (loss_bf16, ref)

    print("KERNEL_OK")
</pallas_src>

<mosaic_0001>
module attributes {stable_mosaic.version = 11 : i64} {
  func.func @kernel(%arg0: i32, %arg1: i32, %arg2: memref<8x32xf32, #tpu.memory_space<vmem>>, %arg3: memref<8x32xf32, #tpu.memory_space<vmem>>, %arg4: memref<8x1xi32, #tpu.memory_space<vmem>>, %arg5: memref<1x8x128xf32, #tpu.memory_space<vmem>>, %arg6: memref<2x8x1xf32, #tpu.memory_space<vmem>>, %arg7: memref<2x8x1xf32, #tpu.memory_space<vmem>>, %arg8: memref<2x8x1xf32, #tpu.memory_space<vmem>>) attributes {dimension_semantics = [#tpu.dimension_semantics<parallel>, #tpu.dimension_semantics<arbitrary>], iteration_bounds = array<i64: 1, 1>, scalar_prefetch = 0 : i64, scratch_operands = 3 : i64, tpu.core_type = #tpu.core_type<tc>, window_params = [{transform_indices = @transform_0, window_bounds = array<i64: 8, 32>}, {transform_indices = @transform_1, window_bounds = array<i64: 8, 32>}, {transform_indices = @transform_2, window_bounds = array<i64: 8, 1>}, {transform_indices = @transform_3, window_bounds = array<i64: 1, 8, 128>}]} {
    %c0_i32 = arith.constant 0 : i32
    %0 = arith.cmpi eq, %arg1, %c0_i32 : i32
    %1 = arith.extui %0 : i1 to i32
    %c0_i32_0 = arith.constant 0 : i32
    %2 = arith.cmpi ne, %1, %c0_i32_0 : i32
    scf.if %2 {
      %cst_54 = arith.constant -1.000000e+30 : f32
      %93 = vector.broadcast %cst_54 : f32 to vector<2x8x1xf32>
      %c0_55 = arith.constant 0 : index
      %c0_56 = arith.constant 0 : index
      %c0_57 = arith.constant 0 : index
      %94 = vector.load %arg6[%c0_55, %c0_56, %c0_57] : memref<2x8x1xf32, #tpu.memory_space<vmem>>, vector<2x8x1xf32>
      tpu.vector_store %arg6[%c0_55, %c0_56, %c0_57], %93 {strides = array<i32>} : memref<2x8x1xf32, #tpu.memory_space<vmem>>, vector<2x8x1xf32>,
      %cst_58 = arith.constant 0.000000e+00 : f32
      %95 = vector.broadcast %cst_58 : f32 to vector<2x8x1xf32>
      %c0_59 = arith.constant 0 : index
      %c0_60 = arith.constant 0 : index
      %c0_61 = arith.constant 0 : index
      %96 = vector.load %arg7[%c0_59, %c0_60, %c0_61] : memref<2x8x1xf32, #tpu.memory_space<vmem>>, vector<2x8x1xf32>
      tpu.vector_store %arg7[%c0_59, %c0_60, %c0_61], %95 {strides = array<i32>} : memref<2x8x1xf32, #tpu.memory_space<vmem>>, vector<2x8x1xf32>,
      %cst_62 = arith.constant 0.000000e+00 : f32
      %97 = vector.broadcast %cst_62 : f32 to vector<2x8x1xf32>
      %c0_63 = arith.constant 0 : index
      %c0_64 = arith.constant 0 : index
      %c0_65 = arith.constant 0 : index
      %98 = vector.load %arg8[%c0_63, %c0_64, %c0_65] : memref<2x8x1xf32, #tpu.memory_space<vmem>>, vector<2x8x1xf32>
      tpu.vector_store %arg8[%c0_63, %c0_64, %c0_65], %97 {strides = array<i32>} : memref<2x8x1xf32, #tpu.memory_space<vmem>>, vector<2x8x1xf32>,
    } else {
    }
    %c0 = arith.constant 0 : index
    %c0_1 = arith.constant 0 : index
    %3 = vector.load %arg4[%c0, %c0_1] : memref<8x1xi32, #tpu.memory_space<vmem>>, vector<8x1xi32>
    %4 = tpu.iota {dimensions = array<i32: 0>} : vector<8x1xi32>
    %c8_i32 = arith.constant 8 : i32
    %5 = arith.muli %arg0, %c8_i32 : i32
    %6 = vector.broadcast %5 : i32 to vector<8x1xi32>
    %7 = arith.addi %4, %6 : vector<8x1xi32>
    %c8_i32_2 = arith.constant 8 : i32
    %8 = vector.broadcast %c8_i32_2 : i32 to vector<8x1xi32>
    %9 = arith.cmpi slt, %7, %8 : vector<8x1xi32>
    %10 = tpu.iota {dimensions = array<i32: 1>} : vector<8x32xi32>
    %c32_i32 = arith.constant 32 : i32
    %11 = arith.muli %arg1, %c32_i32 : i32
    %12 = vector.broadcast %11 : i32 to vector<8x32xi32>
    %13 = arith.addi %10, %12 : vector<8x32xi32>
    %c32_i32_3 = arith.constant 32 : i32
    %14 = vector.broadcast %c32_i32_3 : i32 to vector<8x32xi32>
    %15 = arith.cmpi slt, %13, %14 : vector<8x32xi32>
    %16 = vector.broadcast %9 : vector<8x1xi1> to vector<8x32xi1>
    %17 = arith.andi %16, %15 : vector<8x32xi1>
    %18 = vector.broadcast %3 : vector<8x1xi32> to vector<8x32xi32>
    %19 = arith.cmpi eq, %13, %18 : vector<8x32xi32>
    %c0_4 = arith.constant 0 : index
    %c0_5 = arith.constant 0 : index
    %20 = vector.load %arg2[%c0_4, %c0_5] : memref<8x32xf32, #tpu.memory_space<vmem>>, vector<8x32xf32>
    %cst = arith.constant -1.000000e+30 : f32
    %21 = vector.broadcast %cst : f32 to vector<8x32xf32>
    %22 = arith.select %17, %20, %21 : vector<8x32xi1>, vector<8x32xf32>
    %c0_6 = arith.constant 0 : index
    %c0_7 = arith.constant 0 : index
    %c0_8 = arith.constant 0 : index
    %23 = vector.load %arg6[%c0_6, %c0_7, %c0_8] : memref<2x8x1xf32, #tpu.memory_space<vmem>>, vector<1x8x1xf32>
    %24 = vector.shape_cast %23 : vector<1x8x1xf32> to vector<8x1xf32>
    %cst_9 = arith.constant dense<0xFF800000> : vector<8xf32>
    %25 = vector.multi_reduction <maximumf>, %22, %cst_9 [1] : vector<8x32xf32> to vector<8xf32>
    %26 = vector.shape_cast %25 : vector<8xf32> to vector<8x1xf32>
    %27 = arith.maximumf %24, %26 : vector<8x1xf32>
    %28 = arith.subf %24, %27 : vector<8x1xf32>
    %29 = math.exp %28 : vector<8x1xf32>
    %c0_10 = arith.constant 0 : index
    %c0_11 = arith.constant 0 : index
    %c0_12 = arith.constant 0 : index
    %30 = vector.load %arg7[%c0_10, %c0_11, %c0_12] : memref<2x8x1xf32, #tpu.memory_space<vmem>>, vector<1x8x1xf32>
    %31 = vector.shape_cast %30 : vector<1x8x1xf32> to vector<8x1xf32>
    %32 = arith.mulf %29, %31 : vector<8x1xf32>
    %33 = vector.broadcast %27 : vector<8x1xf32> to vector<8x32xf32>
    %34 = arith.subf %22, %33 : vector<8x32xf32>
    %35 = math.exp %34 : vector<8x32xf32>
    %cst_13 = arith.constant dense<0.000000e+00> : vector<8xf32>
    %36 = vector.multi_reduction <add>, %35, %cst_13 [1] : vector<8x32xf32> to vector<8xf32>
    %37 = vector.shape_cast %36 : vector<8xf32> to vector<8x1xf32>
    %38 = arith.addf %32, %37 : vector<8x1xf32>
    %c0_14 = arith.constant 0 : index
    %c0_15 = arith.constant 0 : index
    %c0_16 = arith.constant 0 : index
    %39 = vector.load %arg7[%c0_14, %c0_15, %c0_16] : memref<2x8x1xf32, #tpu.memory_space<vmem>>, vector<1x8x1xf32>
    %40 = vector.shape_cast %39 : vector<1x8x1xf32> to vector<8x1xf32>
    %41 = vector.shape_cast %38 : vector<8x1xf32> to vector<1x8x1xf32>
    tpu.vector_store %arg7[%c0_14, %c0_15, %c0_16], %41 {strides = array<i32>} : memref<2x8x1xf32, #tpu.memory_space<vmem>>, vector<1x8x1xf32>,
    %c0_17 = arith.constant 0 : index
    %c0_18 = arith.constant 0 : index
    %c0_19 = arith.constant 0 : index
    %42 = vector.load %arg8[%c0_17, %c0_18, %c0_19] : memref<2x8x1xf32, #tpu.memory_space<vmem>>, vector<1x8x1xf32>
    %43 = vector.shape_cast %42 : vector<1x8x1xf32> to vector<8x1xf32>
    %cst_20 = arith.constant 0.000000e+00 : f32
    %44 = vector.broadcast %cst_20 : f32 to vector<8x32xf32>
    %45 = arith.select %19, %22, %44 : vector<8x32xi1>, vector<8x32xf32>
    %cst_21 = arith.constant dense<0.000000e+00> : vector<8xf32>
    %46 = vector.multi_reduction <add>, %45, %cst_21 [1] : vector<8x32xf32> to vector<8xf32>
    %47 = vector.shape_cast %46 : vector<8xf32> to vector<8x1xf32>
    %48 = arith.addf %43, %47 : vector<8x1xf32>
    %c0_22 = arith.constant 0 : index
    %c0_23 = arith.constant 0 : index
    %c0_24 = arith.constant 0 : index
    %49 = vector.load %arg8[%c0_22, %c0_23, %c0_24] : memref<2x8x1xf32, #tpu.memory_space<vmem>>, vector<1x8x1xf32>
    %50 = vector.shape_cast %49 : vector<1x8x1xf32> to vector<8x1xf32>
    %51 = vector.shape_cast %48 : vector<8x1xf32> to vector<1x8x1xf32>
    tpu.vector_store %arg8[%c0_22, %c0_23, %c0_24], %51 {strides = array<i32>} : memref<2x8x1xf32, #tpu.memory_space<vmem>>, vector<1x8x1xf32>,
    %c0_25 = arith.constant 0 : index
    %c0_26 = arith.constant 0 : index
    %c0_27 = arith.constant 0 : index
    %52 = vector.load %arg6[%c0_25, %c0_26, %c0_27] : memref<2x8x1xf32, #tpu.memory_space<vmem>>, vector<1x8x1xf32>
    %53 = vector.shape_cast %52 : vector<1x8x1xf32> to vector<8x1xf32>
    %54 = vector.shape_cast %27 : vector<8x1xf32> to vector<1x8x1xf32>
    tpu.vector_store %arg6[%c0_25, %c0_26, %c0_27], %54 {strides = array<i32>} : memref<2x8x1xf32, #tpu.memory_space<vmem>>, vector<1x8x1xf32>,
    %c0_28 = arith.constant 0 : index
    %c0_29 = arith.constant 0 : index
    %55 = vector.load %arg3[%c0_28, %c0_29] : memref<8x32xf32, #tpu.memory_space<vmem>>, vector<8x32xf32>
    %cst_30 = arith.constant -1.000000e+30 : f32
    %56 = vector.broadcast %cst_30 : f32 to vector<8x32xf32>
    %57 = arith.select %17, %55, %56 : vector<8x32xi1>, vector<8x32xf32>
    %c1 = arith.constant 1 : index
    %c0_31 = arith.constant 0 : index
    %c0_32 = arith.constant 0 : index
    %58 = vector.load %arg6[%c1, %c0_31, %c0_32] : memref<2x8x1xf32, #tpu.memory_space<vmem>>, vector<1x8x1xf32>
    %59 = vector.shape_cast %58 : vector<1x8x1xf32> to vector<8x1xf32>
    %cst_33 = arith.constant dense<0xFF800000> : vector<8xf32>
    %60 = vector.multi_reduction <maximumf>, %57, %cst_33 [1] : vector<8x32xf32> to vector<8xf32>
    %61 = vector.shape_cast %60 : vector<8xf32> to vector<8x1xf32>
    %62 = arith.maximumf %59, %61 : vector<8x1xf32>
    %63 = arith.subf %59, %62 : vector<8x1xf32>
    %64 = math.exp %63 : vector<8x1xf32>
    %c1_34 = arith.constant 1 : index
    %c0_35 = arith.constant 0 : index
    %c0_36 = arith.constant 0 : index
    %65 = vector.load %arg7[%c1_34, %c0_35, %c0_36] : memref<2x8x1xf32, #tpu.memory_space<vmem>>, vector<1x8x1xf32>
    %66 = vector.shape_cast %65 : vector<1x8x1xf32> to vector<8x1xf32>
    %67 = arith.mulf %64, %66 : vector<8x1xf32>
    %68 = vector.broadcast %62 : vector<8x1xf32> to vector<8x32xf32>
    %69 = arith.subf %57, %68 : vector<8x32xf32>
    %70 = math.exp %69 : vector<8x32xf32>
    %cst_37 = arith.constant dense<0.000000e+00> : vector<8xf32>
    %71 = vector.multi_reduction <add>, %70, %cst_37 [1] : vector<8x32xf32> to vector<8xf32>
    %72 = vector.shape_cast %71 : vector<8xf32> to vector<8x1xf32>
    %73 = arith.addf %67, %72 : vector<8x1xf32>
    %c1_38 = arith.constant 1 : index
    %c0_39 = arith.constant 0 : index
    %c0_40 = arith.constant 0 : index
    %74 = vector.load %arg7[%c1_38, %c0_39, %c0_40] : memref<2x8x1xf32, #tpu.memory_space<vmem>>, vector<1x8x1xf32>
    %75 = vector.shape_cast %74 : vector<1x8x1xf32> to vector<8x1xf32>
    %76 = vector.shape_cast %73 : vector<8x1xf32> to vector<1x8x1xf32>
    tpu.vector_store %arg7[%c1_38, %c0_39, %c0_40], %76 {strides = array<i32>} : memref<2x8x1xf32, #tpu.memory_space<vmem>>, vector<1x8x1xf32>,
    %c1_41 = arith.constant 1 : index
    %c0_42 = arith.constant 0 : index
    %c0_43 = arith.constant 0 : index
    %77 = vector.load %arg8[%c1_41, %c0_42, %c0_43] : memref<2x8x1xf32, #tpu.memory_space<vmem>>, vector<1x8x1xf32>
    %78 = vector.shape_cast %77 : vector<1x8x1xf32> to vector<8x1xf32>
    %cst_44 = arith.constant 0.000000e+00 : f32
    %79 = vector.broadcast %cst_44 : f32 to vector<8x32xf32>
    %80 = arith.select %19, %57, %79 : vector<8x32xi1>, vector<8x32xf32>
    %cst_45 = arith.constant dense<0.000000e+00> : vector<8xf32>
    %81 = vector.multi_reduction <add>, %80, %cst_45 [1] : vector<8x32xf32> to vector<8xf32>
    %82 = vector.shape_cast %81 : vector<8xf32> to vector<8x1xf32>
    %83 = arith.addf %78, %82 : vector<8x1xf32>
    %c1_46 = arith.constant 1 : index
    %c0_47 = arith.constant 0 : index
    %c0_48 = arith.constant 0 : index
    %84 = vector.load %arg8[%c1_46, %c0_47, %c0_48] : memref<2x8x1xf32, #tpu.memory_space<vmem>>, vector<1x8x1xf32>
    %85 = vector.shape_cast %84 : vector<1x8x1xf32> to vector<8x1xf32>
    %86 = vector.shape_cast %83 : vector<8x1xf32> to vector<1x8x1xf32>
    tpu.vector_store %arg8[%c1_46, %c0_47, %c0_48], %86 {strides = array<i32>} : memref<2x8x1xf32, #tpu.memory_space<vmem>>, vector<1x8x1xf32>,
    %c1_49 = arith.constant 1 : index
    %c0_50 = arith.constant 0 : index
    %c0_51 = arith.constant 0 : index
    %87 = vector.load %arg6[%c1_49, %c0_50, %c0_51] : memref<2x8x1xf32, #tpu.memory_space<vmem>>, vector<1x8x1xf32>
    %88 = vector.shape_cast %87 : vector<1x8x1xf32> to vector<8x1xf32>
    %89 = vector.shape_cast %62 : vector<8x1xf32> to vector<1x8x1xf32>
    tpu.vector_store %arg6[%c1_49, %c0_50, %c0_51], %89 {strides = array<i32>} : memref<2x8x1xf32, #tpu.memory_space<vmem>>, vector<1x8x1xf32>,
    %c0_i32_52 = arith.constant 0 : i32
    %90 = arith.cmpi eq, %arg1, %c0_i32_52 : i32
    %91 = arith.extui %90 : i1 to i32
    %c0_i32_53 = arith.constant 0 : i32
    %92 = arith.cmpi ne, %91, %c0_i32_53 : i32
    scf.if %92 {
      %cst_54 = arith.constant 0.000000e+00 : f32
      %93 = vector.broadcast %cst_54 : f32 to vector<8x1xf32>
      %c0_55 = arith.constant 0 : index
      %c0_56 = arith.constant 0 : index
      %c0_57 = arith.constant 0 : index
      %94 = vector.load %arg6[%c0_55, %c0_56, %c0_57] : memref<2x8x1xf32, #tpu.memory_space<vmem>>, vector<1x8x1xf32>
      %95 = vector.shape_cast %94 : vector<1x8x1xf32> to vector<8x1xf32>
      %c0_58 = arith.constant 0 : index
      %c0_59 = arith.constant 0 : index
      %c0_60 = arith.constant 0 : index
      %96 = vector.load %arg7[%c0_58, %c0_59, %c0_60] : memref<2x8x1xf32, #tpu.memory_space<vmem>>, vector<1x8x1xf32>
      %97 = vector.shape_cast %96 : vector<1x8x1xf32> to vector<8x1xf32>
      %98 = math.log %97 : vector<8x1xf32>
      %99 = arith.addf %95, %98 : vector<8x1xf32>
      %c0_61 = arith.constant 0 : index
      %c0_62 = arith.constant 0 : index
      %c0_63 = arith.constant 0 : index
      %100 = vector.load %arg8[%c0_61, %c0_62, %c0_63] : memref<2x8x1xf32, #tpu.memory_space<vmem>>, vector<1x8x1xf32>
      %101 = vector.shape_cast %100 : vector<1x8x1xf32> to vector<8x1xf32>
      %102 = arith.subf %99, %101 : vector<8x1xf32>
      %cst_64 = arith.constant 1.250000e-01 : f32
      %103 = vector.broadcast %cst_64 : f32 to vector<8x1xf32>
      %104 = arith.mulf %103, %102 : vector<8x1xf32>
      %105 = arith.addf %93, %104 : vector<8x1xf32>
      %c1_65 = arith.constant 1 : index
      %c0_66 = arith.constant 0 : index
      %c0_67 = arith.constant 0 : index
      %106 = vector.load %arg6[%c1_65, %c0_66, %c0_67] : memref<2x8x1xf32, #tpu.memory_space<vmem>>, vector<1x8x1xf32>
      %107 = vector.shape_cast %106 : vector<1x8x1xf32> to vector<8x1xf32>
      %c1_68 = arith.constant 1 : index
      %c0_69 = arith.constant 0 : index
      %c0_70 = arith.constant 0 : index
      %108 = vector.load %arg7[%c1_68, %c0_69, %c0_70] : memref<2x8x1xf32, #tpu.memory_space<vmem>>, vector<1x8x1xf32>
      %109 = vector.shape_cast %108 : vector<1x8x1xf32> to vector<8x1xf32>
      %110 = math.log %109 : vector<8x1xf32>
      %111 = arith.addf %107, %110 : vector<8x1xf32>
      %c1_71 = arith.constant 1 : index
      %c0_72 = arith.constant 0 : index
      %c0_73 = arith.constant 0 : index
      %112 = vector.load %arg8[%c1_71, %c0_72, %c0_73] : memref<2x8x1xf32, #tpu.memory_space<vmem>>, vector<1x8x1xf32>
      %113 = vector.shape_cast %112 : vector<1x8x1xf32> to vector<8x1xf32>
      %114 = arith.subf %111, %113 : vector<8x1xf32>
      %cst_74 = arith.constant 5.000000e-02 : f32
      %115 = vector.broadcast %cst_74 : f32 to vector<8x1xf32>
      %116 = arith.mulf %115, %114 : vector<8x1xf32>
      %117 = arith.addf %105, %116 : vector<8x1xf32>
      %cst_75 = arith.constant 0.000000e+00 : f32
      %118 = vector.broadcast %cst_75 : f32 to vector<8x1xf32>
      %119 = arith.select %9, %117, %118 : vector<8x1xi1>, vector<8x1xf32>
      %120 = vector.shape_cast %119 : vector<8x1xf32> to vector<1x8x1xf32>
      %cst_76 = arith.constant dense<0.000000e+00> : vector<1xf32>
      %121 = vector.multi_reduction <add>, %120, %cst_76 [1, 2] : vector<1x8x1xf32> to vector<1xf32>
      %122 = vector.shape_cast %121 : vector<1xf32> to vector<1x1x1xf32>
      %123 = vector.extract %122[0, 0, 0] : f32 from vector<1x1x1xf32>
      %124 = vector.broadcast %123 : f32 to vector<1x8x128xf32>
      %c0_77 = arith.constant 0 : index
      %c0_78 = arith.constant 0 : index
      %c0_79 = arith.constant 0 : index
      %125 = vector.load %arg5[%c0_77, %c0_78, %c0_79] : memref<1x8x128xf32, #tpu.memory_space<vmem>>, vector<1x8x128xf32>
      tpu.vector_store %arg5[%c0_77, %c0_78, %c0_79], %124 {strides = array<i32>} : memref<1x8x128xf32, #tpu.memory_space<vmem>>, vector<1x8x128xf32>,
    } else {
    }
    return
  }
  func.func @transform_0(%arg0: i32, %arg1: i32) -> (i32, i32) {
    %c0_i32 = arith.constant 0 : i32
    return %arg0, %arg1 : i32, i32
  }
  func.func @transform_1(%arg0: i32, %arg1: i32) -> (i32, i32) {
    %c0_i32 = arith.constant 0 : i32
    return %arg0, %arg1 : i32, i32
  }
  func.func @transform_2(%arg0: i32, %arg1: i32) -> (i32, i32) {
    %c0_i32 = arith.constant 0 : i32
    %c0_i32_0 = arith.constant 0 : i32
    return %arg0, %c0_i32 : i32, i32
  }
  func.func @transform_3(%arg0: i32, %arg1: i32) -> (i32, i32, i32) {
    %c0_i32 = arith.constant 0 : i32
    %c0_i32_0 = arith.constant 0 : i32
    %c0_i32_1 = arith.constant 0 : i32
    return %arg0, %c0_i32, %c0_i32_0 : i32, i32, i32
  }
}

</mosaic_0001>

<llo_original>
// kernel: tpu_custom_call.1
$region0: #{tpu_custom_call.1}
  #allocation0 [shape = 'u32[]', space=smem, size = 0x4, offset = 0x4, fixed_abs, tag = 'smem constant byte address 0x4 - core index']
  #allocation1 [shape = 'u32[144,128]{1,0:T(1,128)}', space=vmem, size = 0x12000, scoped, tag = 'internal scratch']
  #allocation2 [shape = 'f32[2,8,1]{2,1,0:T(8,128)}', space=vmem, size = 0x2000, scoped, tag = 'scratch operand']
  #allocation3 [shape = 'f32[2,8,1]{2,1,0:T(8,128)}', space=vmem, size = 0x2000, scoped, tag = 'scratch operand']
  #allocation4 [shape = 'f32[2,8,1]{2,1,0:T(8,128)}', space=vmem, size = 0x2000, scoped, tag = 'scratch operand']
  %s0 = inlined_call_operand.vmem [shape: f32[8,32], index: 0, kind: input, shape index: {}]
  %s1 = inlined_call_operand.hbm [shape: f32[8,32], index: 1, kind: input, shape index: {}]
  %s2 = inlined_call_operand.vmem [shape: s32[8,1], index: 2, kind: input, shape index: {}]
  %s3 = inlined_call_operand.hbm [shape: f32[1,8,128], index: 3, kind: output, shape index: {}]
  %s4 = sld [smem:[#allocation0]]
  $region34: #{tpu_custom_call.1} parent=0
    _
  %s6 = ssub.s32 1, %s4
  %s7 = scalar_select 0, %s6, %s4
  $region1: #{tpu_custom_call.1} parent=0
    #allocation5 [shape = 'u8[4096]{0}', space=vmem, size = 0x1000, scoped, tag = 'input window, operand 1, single buffered']
    #allocation6 [shape = 's32[1]{0}', space=sflag, size = 0x4, scoped, tag = 'scoped memory for tpu_custom_call.1']
    #allocation7 [shape = 's32[1]{0}', space=sflag, size = 0x4, scoped, tag = 'scoped memory for tpu_custom_call.1']
    #allocation8 [shape = 'u8[4096]{0}', space=vmem, size = 0x1000, scoped, tag = 'output window, operand 0, single buffered']
    %8 = vsyncpa [#allocation6], 0
    %9 = vsyncpa [#allocation7], 0
    // Predicated region
    $region2: #{tpu_custom_call.1} parent=1 // pred_check
      _
    $region3: #{tpu_custom_call.1} parent=1 // pred_check_branch
      %11 = sbr.rel (0) target = $region5
    $region4: #{tpu_custom_call.1} parent=1 // pred_region
      _
    $region5: #{tpu_custom_call.1} parent=1 // pred_fallthru
      _
    // Predicated region
    $region6: #{tpu_custom_call.1} parent=1 // pred_check
      _
    $region7: #{tpu_custom_call.1} parent=1 // pred_check_branch
      %13 = sbr.rel (0) target = $region9
    $region8: #{tpu_custom_call.1} parent=1 // pred_region
      %s15 = ssub.s32 128, 128
      %16 = vsyncadd [#allocation6], %s15
      %s18 = sshll.u32 [#allocation5], 4
      %s19 = int_to_ptr.vmem [resolvable:$true] %s18
      %21 = dma.hbm_to_vmem [thread:$0]  %s1, 128, %s19, [#allocation6]
    $region9: #{tpu_custom_call.1} parent=1 // pred_fallthru
      _
    // Predicated region
    $region10: #{tpu_custom_call.1} parent=1 // pred_check
      _
    $region11: #{tpu_custom_call.1} parent=1 // pred_check_branch
      %23 = sbr.rel (0) target = $region13
    $region12: #{tpu_custom_call.1} parent=1 // pred_region
      _
    $region13: #{tpu_custom_call.1} parent=1 // pred_fallthru
      _
    // Predicated region
    $region14: #{tpu_custom_call.1} parent=1 // pred_check
      _
    $region15: #{tpu_custom_call.1} parent=1 // pred_check_branch
      %25 = sbr.rel (0) target = $region17
    $region16: #{tpu_custom_call.1} parent=1 // pred_region
      %26 = dma.done [#allocation6], 128
    $region17: #{tpu_custom_call.1} parent=1 // pred_fallthru
      _
    %p27 = scmp.eq.s32.totalorder 0, 0
    // Predicated region
    $region18: #{tpu_custom_call.1} parent=1 // pred_check
      %p28 = pneg %p27
    $region19: #{tpu_custom_call.1} parent=1 // pred_check_branch
      %30 = sbr.rel (%p28) target = $region21
    $region20: #{tpu_custom_call.1} parent=1 // pred_region
      %vm31 = vcmask 7168
      %32 = vst.msk [vmem:[#allocation2] sm:$0xff] %vm31, -1e+30
      %33 = vst.msk [vmem:[#allocation2 + $0x8] sm:$0xff] %vm31, -1e+30
      %34 = vst.msk [vmem:[#allocation3] sm:$0xff] %vm31, 0.0
      %35 = vst.msk [vmem:[#allocation3 + $0x8] sm:$0xff] %vm31, 0.0
      %36 = vst.msk [vmem:[#allocation4] sm:$0xff] %vm31, 0.0
      %37 = vst.msk [vmem:[#allocation4 + $0x8] sm:$0xff] %vm31, 0.0
    $region21: #{tpu_custom_call.1} parent=1 // pred_fallthru
      _
    %v38 = vld [vmem:[%s2] sm:$0xff]
    %v39 = vlaneseq
    %v40 = vshrl.u32 %v39, 7
    %s41 = smul.u32 0, 8
    %v42 = vstv %s41
    %v43 = vadd.s32 %v40, %v42
    %vm44 = vcmp.lt.s32.totalorder %v43, 8
    %v45 = vlaneseq
    %v46 = vand.u32 %v45, 127
    %s47 = smul.u32 0, 32
    %v48 = vstv %s47
    %v49 = vadd.s32 %v46, %v48
    %vm50 = vcmp.lt.s32.totalorder %v49, 32
    %v51 = vsel %vm44, 1, 0
    %vm52 = vcmp.eq.s32.totalorder %v51, 1
    %vm53 = vmand %vm52, %vm50
    %54 = vset.pattern.permute.xlu0 0
    %55 = vperm.xlu0 %54, %v38
    %v56 = vpop.permute.xlu0 %55
    %vm57 = vcmp.eq.s32.totalorder %v49, %v56
    %v58 = vld [vmem:[%s0] sm:$0xff]
    %v59 = vsel %vm53, %v58, -1e+30
    %v60 = vld [vmem:[#allocation2] sm:$0xff]
    %vm61 = vcmask 261120
    %v62 = vsel %vm61, %v59, -inf
    %63 = vmax.xlane.f32.xlu0 %v62
    %v64 = vpop.xlane.xlu0 %63
    %v65 = vmax.f32 %v60, %v64
    %v66 = vsub.f32 %v60, %v65
    %v67 = vmul.f32 %v66, 1.442695
    %v68 = vpow.pop %v67
    %v69 = vld [vmem:[#allocation3] sm:$0xff]
    %v70 = vmul.f32 %v68, %v69
    %72 = vset.pattern.permute.xlu0 0
    %73 = vperm.xlu0 %72, %v65
    %v74 = vpop.permute.xlu0 %73
    %v76 = vsub.f32 %v59, %v74
    %v77 = vmul.f32 %v76, 1.442695
    %v78 = vpow.pop %v77
    %v79 = vsel %vm61, %v78, 0.0
    %80 = vadd.xlane.f32.xlu0 %v79
    %v81 = vpop.xlane.xlu0 %80
    %v82 = vadd.f32 %v70, %v81
    %vm83 = vcmask 7168
    %84 = vst.msk [vmem:[#allocation3] sm:$0xff] %vm83, %v82
    %v85 = vld [vmem:[#allocation4] sm:$0xff]
    %v86 = vsel %vm57, %v59, 0.0
    %v87 = vsel %vm61, %v86, 0.0
    %88 = vadd.xlane.f32.xlu0 %v87
    %v89 = vpop.xlane.xlu0 %88
    %v90 = vadd.f32 %v85, %v89
    %91 = vst.msk [vmem:[#allocation4] sm:$0xff] %vm83, %v90
    %92 = vst.msk [vmem:[#allocation2] sm:$0xff] %vm83, %v65
    %v93 = vld [vmem:[#allocation5] sm:$0xff]
    %v94 = vsel %vm53, %v93, -1e+30
    %s95 = scalar_lea.vmem [#allocation2], 8
    %v96 = vld [vmem:[%s95] sm:$0xff]
    %v97 = vsel %vm61, %v94, -inf
    %98 = vmax.xlane.f32.xlu0 %v97
    %v99 = vpop.xlane.xlu0 %98
    %v100 = vmax.f32 %v96, %v99
    %v101 = vsub.f32 %v96, %v100
    %v102 = vmul.f32 %v101, 1.442695
    %v103 = vpow.pop %v102
    %s104 = scalar_lea.vmem [#allocation3], 8
    %v105 = vld [vmem:[%s104] sm:$0xff]
    %v106 = vmul.f32 %v103, %v105
    %108 = vset.pattern.permute.xlu0 0
    %109 = vperm.xlu0 %108, %v100
    %v110 = vpop.permute.xlu0 %109
    %v112 = vsub.f32 %v94, %v110
    %v113 = vmul.f32 %v112, 1.442695
    %v114 = vpow.pop %v113
    %v115 = vsel %vm61, %v114, 0.0
    %116 = vadd.xlane.f32.xlu0 %v115
    %v117 = vpop.xlane.xlu0 %116
    %v118 = vadd.f32 %v106, %v117
    %119 = vst.msk [vmem:[%s104] sm:$0xff] %vm83, %v118
    %s120 = scalar_lea.vmem [#allocation4], 8
    %v121 = vld [vmem:[%s120] sm:$0xff]
    %v122 = vsel %vm57, %v94, 0.0
    %v123 = vsel %vm61, %v122, 0.0
    %124 = vadd.xlane.f32.xlu0 %v123
    %v125 = vpop.xlane.xlu0 %124
    %v126 = vadd.f32 %v121, %v125
    %127 = vst.msk [vmem:[%s120] sm:$0xff] %vm83, %v126
    %128 = vst.msk [vmem:[%s95] sm:$0xff] %vm83, %v100
    // Predicated region
    $region22: #{tpu_custom_call.1} parent=1 // pred_check
      %p129 = pneg %p27
    $region23: #{tpu_custom_call.1} parent=1 // pred_check_branch
      %131 = sbr.rel (%p129) target = $region25
    $region24: #{tpu_custom_call.1} parent=1 // pred_region
      %v132 = vld [vmem:[#allocation2] sm:$0xff]
      %v133 = vld [vmem:[#allocation3] sm:$0xff]
      %v134 = vlog2.pop %v133
      %v135 = vmul.f32 %v134, 0.6931472
      %v136 = vadd.f32 %v132, %v135
      %v137 = vld [vmem:[#allocation4] sm:$0xff]
      %v138 = vsub.f32 %v136, %v137
      %v139 = vmul.f32 %v138, 0.125
      %v140 = vadd.f32 %v139, 0.0
      %v141 = vld [vmem:[%s95] sm:$0xff]
      %v142 = vld [vmem:[%s104] sm:$0xff]
      %v143 = vlog2.pop %v142
      %v144 = vmul.f32 %v143, 0.6931472
      %v145 = vadd.f32 %v141, %v144
      %v146 = vld [vmem:[%s120] sm:$0xff]
      %v147 = vsub.f32 %v145, %v146
      %v148 = vmul.f32 %v147, 0.05
      %v149 = vadd.f32 %v140, %v148
      %v150 = vsel %vm44, %v149, 0.0
      %v151 = vsel %vm83, %v150, 0.0
      %152 = vadd.xlane.f32.xlu0 %v151
      %v153 = vpop.xlane.xlu0 %152
      %v154 = vrot.slane %v153, 4
      %v155 = vadd.f32 %v153, %v154
      %v156 = vrot.slane %v155, 2
      %v157 = vadd.f32 %v155, %v156
      %v158 = vrot.slane %v157, 1
      %v159 = vadd.f32 %v157, %v158
      %s160 = vtos %v159
      %v161 = vstv %s160
      %162 = vst [vmem:[#allocation8] sm:$0xff] %v161
    $region25: #{tpu_custom_call.1} parent=1 // pred_fallthru
      _
    // Predicated region
    $region26: #{tpu_custom_call.1} parent=1 // pred_check
      _
    $region27: #{tpu_custom_call.1} parent=1 // pred_check_branch
      %164 = sbr.rel (0) target = $region29
    $region28: #{tpu_custom_call.1} parent=1 // pred_region
      %s166 = ssub.s32 128, 128
      %167 = vsyncadd [#allocation7], %s166
      %s169 = sshll.u32 [#allocation8], 4
      %s170 = int_to_ptr.vmem [resolvable:$true] %s169
      %172 = dma.vmem_to_hbm [thread:$0]  %s170, 128, %s3, [#allocation7]
    $region29: #{tpu_custom_call.1} parent=1 // pred_fallthru
      _
    // Predicated region
    $region30: #{tpu_custom_call.1} parent=1 // pred_check
      _
    $region31: #{tpu_custom_call.1} parent=1 // pred_check_branch
      %174 = sbr.rel (0) target = $region33
    $region32: #{tpu_custom_call.1} parent=1 // pred_region
      %175 = dma.done [#allocation7], 128
    $region33: #{tpu_custom_call.1} parent=1 // pred_fallthru
      _
    %176 = vsyncpa [#allocation6], 1
    %177 = vsyncpa [#allocation7], 1

</llo_original>
